<compile_context>
chip_gen: v6e
topology: v6e:2x2x1
jax: 0.10.0
libtpu: 0.0.40
codegen_flags: <defaults>
</compile_context>

<pallas_src>
import jax
import jax.numpy as jnp
from jax.experimental import pallas as pl
from jax.experimental.pallas import tpu as pltpu


def _round_up(x, m):
    return (x + m - 1) // m * m


def _w8a16_kernel(x_ref, w_ref, scales_ref, bias_ref, out_ref, acc_ref):
    # x_ref:      [tm, tk]  activations (any float dtype)
    # w_ref:      [tk, tn]  int8 weights, already transposed to (K, N)
    # scales_ref: [1,  tn]  float32 per-output-channel scale
    # bias_ref:   [1,  tn]  float32 bias
    # out_ref:    [tm, tn]  output tile
    # acc_ref:    [tm, tn]  float32 VMEM accumulator (persists across K steps)
    k = pl.program_id(2)

    @pl.when(k == 0)
    def _():
        acc_ref[...] = jnp.zeros_like(acc_ref)

    # int8 -> bf16 is exact; bf16 feeds the fast MXU path.  Accumulate in f32.
    x = x_ref[...].astype(jnp.bfloat16)
    w = w_ref[...].astype(jnp.bfloat16)
    acc_ref[...] += jnp.dot(x, w, preferred_element_type=jnp.float32)

    @pl.when(k == pl.num_programs(2) - 1)
    def _():
        out_ref[...] = (
            acc_ref[...] * scales_ref[...] + bias_ref[...]
        ).astype(out_ref.dtype)


def w8a16_linear(x, int8_weights, scales, bias=None):
    """x: [..., K]; int8_weights: [N, K] int8; scales: [N]; bias: [1, N] or None."""
    *lead, K = x.shape
    N = int8_weights.shape[0]
    M = 1
    for d in lead:
        M *= d

    x2d = x.reshape(M, K)
    w_t = int8_weights.T  # (K, N) int8 — one-time relayout, amortized over calls
    scales2d = scales.reshape(1, N).astype(jnp.float32)
    if bias is None:
        bias2d = jnp.zeros((1, N), jnp.float32)
    else:
        bias2d = bias.reshape(1, N).astype(jnp.float32)

    # Tile sizes: small-M aware (tm = round_up(M, 8)), lane-dense N, 128-aligned K.
    tm = min(_round_up(M, 8), 256)
    tn = min(_round_up(N, 128), 512)
    tk = min(_round_up(K, 128), 512)

    M_pad = _round_up(M, tm)
    N_pad = _round_up(N, tn)
    K_pad = _round_up(K, tk)

    if (M_pad, K_pad) != (M, K):
        x2d = jnp.pad(x2d, ((0, M_pad - M), (0, K_pad - K)))
    if (K_pad, N_pad) != (K, N):
        w_t = jnp.pad(w_t, ((0, K_pad - K), (0, N_pad - N)))
    if N_pad != N:
        scales2d = jnp.pad(scales2d, ((0, 0), (0, N_pad - N)))
        bias2d = jnp.pad(bias2d, ((0, 0), (0, N_pad - N)))

    grid = (M_pad // tm, N_pad // tn, K_pad // tk)  # reduction axis (K) last

    out2d = pl.pallas_call(
        _w8a16_kernel,
        out_shape=jax.ShapeDtypeStruct((M_pad, N_pad), x.dtype),
        grid_spec=pltpu.PrefetchScalarGridSpec(
            num_scalar_prefetch=0,
            grid=grid,
            in_specs=[
                pl.BlockSpec((tm, tk), lambda i, j, k: (i, k)),   # activations
                pl.BlockSpec((tk, tn), lambda i, j, k: (k, j)),   # int8 weights (K,N)
                pl.BlockSpec((1, tn), lambda i, j, k: (0, j)),    # scales
                pl.BlockSpec((1, tn), lambda i, j, k: (0, j)),    # bias
            ],
            out_specs=pl.BlockSpec((tm, tn), lambda i, j, k: (i, j)),
            scratch_shapes=[pltpu.VMEM((tm, tn), jnp.float32)],
        ),
        compiler_params=pltpu.CompilerParams(
            dimension_semantics=("parallel", "parallel", "arbitrary"),
        ),
    )(x2d, w_t, scales2d, bias2d)

    out2d = out2d[:M, :N]
    return out2d.reshape(*lead, N)


def _reference_f32(x, int8_weights, scales, bias):
    w = int8_weights.astype(jnp.float32)
    out = jnp.einsum("...k,nk->...n", x.astype(jnp.float32), w) * scales.reshape(1, -1)
    return out + bias


def _reference_bf16(x, int8_weights, scales, bias):
    # Matches the kernel's numerics: bf16 MXU inputs, f32 accumulation.
    xb = x.astype(jnp.bfloat16)
    wb = int8_weights.astype(jnp.bfloat16)
    out = jnp.einsum(
        "...k,nk->...n", xb, wb, preferred_element_type=jnp.float32
    ) * scales.reshape(1, -1)
    return out + bias


if __name__ == "__main__":
    # Small shapes consistent with the module: batch=2, seq=8, in=32, out=64.
    batch, seq, in_features, out_features = 2, 8, 32, 64

    key = jax.random.PRNGKey(0)
    k_x, k_w, k_s, k_b = jax.random.split(key, 4)

    x = jax.random.normal(k_x, (batch, seq, in_features), dtype=jnp.float32)
    int8_weights = jax.random.randint(
        k_w, (out_features, in_features), -128, 127, dtype=jnp.int8
    )
    scales = jax.random.normal(k_s, (out_features,), dtype=jnp.float32)
    bias = jax.random.normal(k_b, (1, out_features), dtype=jnp.float32)

    out = w8a16_linear(x, int8_weights, scales, bias)
    out = jax.block_until_ready(out)
    assert out.shape == (batch, seq, out_features)

    # Tight check vs a reference that mirrors the kernel's bf16-in / f32-acc path.
    ref_bf16 = _reference_bf16(x, int8_weights, scales, bias)
    assert jnp.allclose(out, ref_bf16, rtol=1e-2, atol=1e-2), "mismatch vs bf16 reference"

    # Looser check vs exact f32 module semantics (bf16 activation rounding only).
    ref_f32 = _reference_f32(x, int8_weights, scales, bias)
    rel_err = jnp.max(jnp.abs(out - ref_f32)) / (jnp.max(jnp.abs(ref_f32)) + 1e-6)
    assert rel_err < 2e-2, f"relative error vs f32 reference too large: {rel_err}"

    print("KERNEL_OK")
</pallas_src>

<mosaic_0001>
module attributes {stable_mosaic.version = 11 : i64} {
  func.func @_w8a16_kernel(%arg0: i32, %arg1: i32, %arg2: i32, %arg3: memref<16x128xf32, #tpu.memory_space<vmem>>, %arg4: memref<128x128xi8, #tpu.memory_space<vmem>>, %arg5: memref<1x128xf32, #tpu.memory_space<vmem>>, %arg6: memref<1x128xf32, #tpu.memory_space<vmem>>, %arg7: memref<16x128xf32, #tpu.memory_space<vmem>>, %arg8: memref<16x128xf32, #tpu.memory_space<vmem>>) attributes {dimension_semantics = [#tpu.dimension_semantics<parallel>, #tpu.dimension_semantics<parallel>, #tpu.dimension_semantics<arbitrary>], iteration_bounds = array<i64: 1, 1, 1>, scalar_prefetch = 0 : i64, scratch_operands = 1 : i64, tpu.core_type = #tpu.core_type<tc>, window_params = [{transform_indices = @transform_0, window_bounds = array<i64: 16, 128>}, {transform_indices = @transform_1, window_bounds = array<i64: 128, 128>}, {transform_indices = @transform_2, window_bounds = array<i64: 1, 128>}, {transform_indices = @transform_3, window_bounds = array<i64: 1, 128>}, {transform_indices = @transform_4, window_bounds = array<i64: 16, 128>}]} {
    %c0_i32 = arith.constant 0 : i32
    %0 = arith.cmpi eq, %arg2, %c0_i32 : i32
    %1 = arith.extui %0 : i1 to i32
    %c0_i32_0 = arith.constant 0 : i32
    %2 = arith.cmpi ne, %1, %c0_i32_0 : i32
    scf.if %2 {
      %cst_10 = arith.constant 0.000000e+00 : f32
      %14 = vector.broadcast %cst_10 : f32 to vector<16x128xf32>
      %c0_11 = arith.constant 0 : index
      %c0_12 = arith.constant 0 : index
      %15 = vector.load %arg8[%c0_11, %c0_12] : memref<16x128xf32, #tpu.memory_space<vmem>>, vector<16x128xf32>
      tpu.vector_store %arg8[%c0_11, %c0_12], %14 {strides = array<i32>} : memref<16x128xf32, #tpu.memory_space<vmem>>, vector<16x128xf32>,
    } else {
    }
    %c0 = arith.constant 0 : index
    %c0_1 = arith.constant 0 : index
    %3 = vector.load %arg3[%c0, %c0_1] : memref<16x128xf32, #tpu.memory_space<vmem>>, vector<16x128xf32>
    %4 = arith.truncf %3 : vector<16x128xf32> to vector<16x128xbf16>
    %c0_2 = arith.constant 0 : index
    %c0_3 = arith.constant 0 : index
    %5 = vector.load %arg4[%c0_2, %c0_3] : memref<128x128xi8, #tpu.memory_space<vmem>>, vector<128x128xi8>
    %6 = arith.sitofp %5 : vector<128x128xi8> to vector<128x128xbf16>
    %c0_4 = arith.constant 0 : index
    %c0_5 = arith.constant 0 : index
    %7 = vector.load %arg8[%c0_4, %c0_5] : memref<16x128xf32, #tpu.memory_space<vmem>>, vector<16x128xf32>
    %cst = arith.constant dense<0.000000e+00> : vector<16x128xf32>
    %8 = tpu.matmul %4, %6, %cst {dimension_numbers = #tpu.dot_dimension_numbers<[1], [0], [0], [1], [0, 0, 1, 1], [], []>} : vector<16x128xbf16>, vector<128x128xbf16>, vector<16x128xf32> -> vector<16x128xf32>
    %9 = arith.addf %7, %8 : vector<16x128xf32>
    %c0_6 = arith.constant 0 : index
    %c0_7 = arith.constant 0 : index
    %10 = vector.load %arg8[%c0_6, %c0_7] : memref<16x128xf32, #tpu.memory_space<vmem>>, vector<16x128xf32>
    tpu.vector_store %arg8[%c0_6, %c0_7], %9 {strides = array<i32>} : memref<16x128xf32, #tpu.memory_space<vmem>>, vector<16x128xf32>,
    %c0_i32_8 = arith.constant 0 : i32
    %11 = arith.cmpi eq, %arg2, %c0_i32_8 : i32
    %12 = arith.extui %11 : i1 to i32
    %c0_i32_9 = arith.constant 0 : i32
    %13 = arith.cmpi ne, %12, %c0_i32_9 : i32
    scf.if %13 {
      %c0_10 = arith.constant 0 : index
      %c0_11 = arith.constant 0 : index
      %14 = vector.load %arg8[%c0_10, %c0_11] : memref<16x128xf32, #tpu.memory_space<vmem>>, vector<16x128xf32>
      %c0_12 = arith.constant 0 : index
      %c0_13 = arith.constant 0 : index
      %15 = vector.load %arg5[%c0_12, %c0_13] : memref<1x128xf32, #tpu.memory_space<vmem>>, vector<1x128xf32>
      %16 = vector.broadcast %15 : vector<1x128xf32> to vector<16x128xf32>
      %17 = arith.mulf %14, %16 : vector<16x128xf32>
      %c0_14 = arith.constant 0 : index
      %c0_15 = arith.constant 0 : index
      %18 = vector.load %arg6[%c0_14, %c0_15] : memref<1x128xf32, #tpu.memory_space<vmem>>, vector<1x128xf32>
      %19 = vector.broadcast %18 : vector<1x128xf32> to vector<16x128xf32>
      %20 = arith.addf %17, %19 : vector<16x128xf32>
      %c0_16 = arith.constant 0 : index
      %c0_17 = arith.constant 0 : index
      %21 = vector.load %arg7[%c0_16, %c0_17] : memref<16x128xf32, #tpu.memory_space<vmem>>, vector<16x128xf32>
      tpu.vector_store %arg7[%c0_16, %c0_17], %20 {strides = array<i32>} : memref<16x128xf32, #tpu.memory_space<vmem>>, vector<16x128xf32>,
    } else {
    }
    return
  }
  func.func @transform_0(%arg0: i32, %arg1: i32, %arg2: i32) -> (i32, i32) {
    %c0_i32 = arith.constant 0 : i32
    return %arg0, %arg2 : i32, i32
  }
  func.func @transform_1(%arg0: i32, %arg1: i32, %arg2: i32) -> (i32, i32) {
    %c0_i32 = arith.constant 0 : i32
    return %arg2, %arg1 : i32, i32
  }
  func.func @transform_2(%arg0: i32, %arg1: i32, %arg2: i32) -> (i32, i32) {
    %c0_i32 = arith.constant 0 : i32
    %c0_i32_0 = arith.constant 0 : i32
    return %c0_i32, %arg1 : i32, i32
  }
  func.func @transform_3(%arg0: i32, %arg1: i32, %arg2: i32) -> (i32, i32) {
    %c0_i32 = arith.constant 0 : i32
    %c0_i32_0 = arith.constant 0 : i32
    return %c0_i32, %arg1 : i32, i32
  }
  func.func @transform_4(%arg0: i32, %arg1: i32, %arg2: i32) -> (i32, i32) {
    %c0_i32 = arith.constant 0 : i32
    return %arg0, %arg1 : i32, i32
  }
}

</mosaic_0001>

<llo_original>
// kernel: tpu_custom_call.1
$region0: #{tpu_custom_call.1}
  #allocation0 [shape = 'u32[]', space=smem, size = 0x4, offset = 0x4, fixed_abs, tag = 'smem constant byte address 0x4 - core index']
  #allocation1 [shape = 'u32[144,128]{1,0:T(1,128)}', space=vmem, size = 0x12000, scoped, tag = 'internal scratch']
  #allocation2 [shape = 'f32[16,128]{1,0:T(8,128)}', space=vmem, size = 0x2000, scoped, tag = 'scratch operand']
  %s0 = inlined_call_operand.hbm [shape: f32[16,128], index: 0, kind: input, shape index: {}]
  %s1 = inlined_call_operand.hbm [shape: s8[128,128], index: 1, kind: input, shape index: {}]
  %s2 = inlined_call_operand.vmem [shape: f32[1,128], index: 2, kind: input, shape index: {}]
  %s3 = inlined_call_operand.vmem [shape: f32[1,128], index: 3, kind: input, shape index: {}]
  %s4 = inlined_call_operand.hbm [shape: f32[16,128], index: 4, kind: output, shape index: {}]
  %s5 = sld [smem:[#allocation0]]
  $region42: #{tpu_custom_call.1} parent=0
    _
  %s7 = ssub.s32 1, %s5
  %s8 = scalar_select 0, %s7, %s5
  $region1: #{tpu_custom_call.1} parent=0
    #allocation3 [shape = 'u8[8192]{0}', space=vmem, size = 0x2000, scoped, tag = 'input window, operand 0, single buffered']
    #allocation4 [shape = 's32[1]{0}', space=sflag, size = 0x4, scoped, tag = 'scoped memory for tpu_custom_call.1']
    #allocation5 [shape = 's32[1]{0}', space=sflag, size = 0x4, scoped, tag = 'scoped memory for tpu_custom_call.1']
    #allocation6 [shape = 'u8[16384]{0}', space=vmem, size = 0x4000, scoped, tag = 'input window, operand 1, single buffered']
    #allocation7 [shape = 's32[1]{0}', space=sflag, size = 0x4, scoped, tag = 'scoped memory for tpu_custom_call.1']
    #allocation8 [shape = 'u8[8192]{0}', space=vmem, size = 0x2000, scoped, tag = 'output window, operand 0, single buffered']
    %9 = vsyncpa [#allocation4], 0
    %10 = vsyncpa [#allocation7], 0
    %11 = vsyncpa [#allocation5], 0
    // Predicated region
    $region2: #{tpu_custom_call.1} parent=1 // pred_check
      _
    $region3: #{tpu_custom_call.1} parent=1 // pred_check_branch
      %13 = sbr.rel (0) target = $region5
    $region4: #{tpu_custom_call.1} parent=1 // pred_region
      %s15 = ssub.s32 256, 256
      %16 = vsyncadd [#allocation4], %s15
      %s17 = sshll.u32 [#allocation3], 4
      %s18 = int_to_ptr.vmem [resolvable:$true] %s17
      %23 = dma.hbm_to_vmem [thread:$0]  %s0, 256, %s18, [#allocation4], 128, 128, 8
    $region5: #{tpu_custom_call.1} parent=1 // pred_fallthru
      _
    // Predicated region
    $region6: #{tpu_custom_call.1} parent=1 // pred_check
      _
    $region7: #{tpu_custom_call.1} parent=1 // pred_check_branch
      %25 = sbr.rel (0) target = $region9
    $region8: #{tpu_custom_call.1} parent=1 // pred_region
      %s27 = ssub.s32 512, 512
      %28 = vsyncadd [#allocation7], %s27
      %s29 = sshll.u32 [#allocation6], 4
      %s30 = int_to_ptr.vmem [resolvable:$true] %s29
      %35 = dma.hbm_to_vmem [thread:$0]  %s1, 512, %s30, [#allocation7], 128, 128, 8
    $region9: #{tpu_custom_call.1} parent=1 // pred_fallthru
      _
    // Predicated region
    $region10: #{tpu_custom_call.1} parent=1 // pred_check
      _
    $region11: #{tpu_custom_call.1} parent=1 // pred_check_branch
      %37 = sbr.rel (0) target = $region13
    $region12: #{tpu_custom_call.1} parent=1 // pred_region
      _
    $region13: #{tpu_custom_call.1} parent=1 // pred_fallthru
      _
    // Predicated region
    $region14: #{tpu_custom_call.1} parent=1 // pred_check
      _
    $region15: #{tpu_custom_call.1} parent=1 // pred_check_branch
      %39 = sbr.rel (0) target = $region17
    $region16: #{tpu_custom_call.1} parent=1 // pred_region
      _
    $region17: #{tpu_custom_call.1} parent=1 // pred_fallthru
      _
    // Predicated region
    $region18: #{tpu_custom_call.1} parent=1 // pred_check
      _
    $region19: #{tpu_custom_call.1} parent=1 // pred_check_branch
      %41 = sbr.rel (0) target = $region21
    $region20: #{tpu_custom_call.1} parent=1 // pred_region
      %42 = dma.done [#allocation4], 256
    $region21: #{tpu_custom_call.1} parent=1 // pred_fallthru
      _
    // Predicated region
    $region22: #{tpu_custom_call.1} parent=1 // pred_check
      _
    $region23: #{tpu_custom_call.1} parent=1 // pred_check_branch
      %44 = sbr.rel (0) target = $region25
    $region24: #{tpu_custom_call.1} parent=1 // pred_region
      %45 = dma.done [#allocation7], 512
    $region25: #{tpu_custom_call.1} parent=1 // pred_fallthru
      _
    %p47 = scmp.eq.s32.totalorder 0, 0
    // Predicated region
    $region26: #{tpu_custom_call.1} parent=1 // pred_check
      %p48 = pneg %p47
    $region27: #{tpu_custom_call.1} parent=1 // pred_check_branch
      %50 = sbr.rel (%p48) target = $region29
    $region28: #{tpu_custom_call.1} parent=1 // pred_region
      %51 = vst [vmem:[#allocation2] sm:$0xff] 0.0
      %52 = vst [vmem:[#allocation2 + $0x8] sm:$0xff] 0.0
    $region29: #{tpu_custom_call.1} parent=1 // pred_fallthru
      _
    %v53 = vld [vmem:[#allocation3] sm:$0xff]
    %v54 = vld [vmem:[#allocation3 + $0x8] sm:$0xff]
    %v55 = vpack.c.bf16 %v54, %v53
    %v56 = vld [vmem:[#allocation6] sm:$0xff]
    %v57 = vld [vmem:[#allocation6 + $0x8] sm:$0xff]
    %v58 = vld [vmem:[#allocation6 + $0x10] sm:$0xff]
    %v59 = vld [vmem:[#allocation6 + $0x18] sm:$0xff]
    %v60 = vunpack.c.l.s8.bf16 %v56
    %v61 = vunpack.c.h.s8.bf16 %v56
    %v62 = vunpack.c.l.s8.bf16 %v57
    %v63 = vunpack.c.h.s8.bf16 %v57
    %v64 = vunpack.c.l.s8.bf16 %v58
    %v65 = vunpack.c.h.s8.bf16 %v58
    %v66 = vunpack.c.l.s8.bf16 %v59
    %v67 = vunpack.c.h.s8.bf16 %v59
    %v68 = vld [vmem:[#allocation2] sm:$0xff]
    %v69 = vld [vmem:[#allocation2 + $0x8] sm:$0xff]
    %70 = vmatprep.subr.bf16.mxu0 0
    %71 = vmatpush1.bf16.msra.mxu0 %v67
    %72 = vmatprep.subr.bf16.mxu0 0
    %73 = vmatpush1.bf16.msra.mxu0 %v66
    %74 = vmatprep.subr.bf16.mxu0 0
    %75 = vmatpush1.bf16.msra.mxu0 %v65
    %76 = vmatprep.subr.bf16.mxu0 0
    %77 = vmatpush1.bf16.msra.mxu0 %v64
    %78 = vmatprep.subr.bf16.mxu0 0
    %79 = vmatpush1.bf16.msra.mxu0 %v63
    %80 = vmatprep.subr.bf16.mxu0 0
    %81 = vmatpush1.bf16.msra.mxu0 %v62
    %82 = vmatprep.subr.bf16.mxu0 0
    %83 = vmatpush1.bf16.msra.mxu0 %v61
    %84 = vmatprep.subr.bf16.mxu0 0
    %85 = vmatpush1.bf16.msra.mxu0 %v60
    %86 = vmatprep.subr.bf16.mxu0 0
    %87 = vmatpush2.bf16.msra.mxu0 0
    %88 = vmatprep.subr.bf16.mxu0 0
    %89 = vmatpush2.bf16.msra.mxu0 0
    %90 = vmatprep.subr.bf16.mxu0 0
    %91 = vmatpush2.bf16.msra.mxu0 0
    %92 = vmatprep.subr.bf16.mxu0 0
    %93 = vmatpush2.bf16.msra.mxu0 0
    %94 = vmatprep.subr.bf16.mxu0 0
    %95 = vmatpush2.bf16.msra.mxu0 0
    %96 = vmatprep.subr.bf16.mxu0 0
    %97 = vmatpush2.bf16.msra.mxu0 0
    %98 = vmatprep.subr.bf16.mxu0 0
    %99 = vmatpush2.bf16.msra.mxu0 0
    %100 = vmatprep.subr.bf16.mxu0 0
    %101 = vmatpush2.bf16.msra.mxu0 0
    %102 = vmatprep.mubr.bf16.mxu0 0
    %103 = vmatmul.mubr.bf16.gmra.mxu0 %v55
    %v104 = vpop.f32.mrf.mxu0
    %v105 = vadd.f32 0.0, %v104
    %v106 = vpop.f32.mrf.mxu0
    %v107 = vpop.f32.mrf.mxu0
    %v108 = vadd.f32 0.0, %v107
    %v109 = vpop.f32.mrf.mxu0
    %110 = vdwg.mxu0
    %v111 = vadd.f32 %v68, %v105
    %v112 = vadd.f32 %v69, %v108
    %113 = vst [vmem:[#allocation2] sm:$0xff] %v111
    %114 = vst [vmem:[#allocation2 + $0x8] sm:$0xff] %v112
    // Predicated region
    $region30: #{tpu_custom_call.1} parent=1 // pred_check
      %p115 = pneg %p47
    $region31: #{tpu_custom_call.1} parent=1 // pred_check_branch
      %117 = sbr.rel (%p115) target = $region33
    $region32: #{tpu_custom_call.1} parent=1 // pred_region
      %v118 = vld [vmem:[#allocation2] sm:$0xff]
      %v119 = vld [vmem:[#allocation2 + $0x8] sm:$0xff]
      %v120 = vld [vmem:[%s2] sm:$0x1]
      %v122 = vlaneseq
      %v123 = vshrl.u32 %v122, 7
      %v124 = vsub.s32 0, %v123
      %v125 = vrot.slane %v120, %v124
      %v127 = vmul.f32 %v118, %v125
      %v128 = vmul.f32 %v119, %v125
      %v129 = vld [vmem:[%s3] sm:$0x1]
      %v131 = vlaneseq
      %v132 = vshrl.u32 %v131, 7
      %v133 = vsub.s32 0, %v132
      %v134 = vrot.slane %v129, %v133
      %v136 = vadd.f32 %v127, %v134
      %v137 = vadd.f32 %v128, %v134
      %138 = vst [vmem:[#allocation8] sm:$0xff] %v136
      %139 = vst [vmem:[#allocation8 + $0x8] sm:$0xff] %v137
    $region33: #{tpu_custom_call.1} parent=1 // pred_fallthru
      _
    // Predicated region
    $region34: #{tpu_custom_call.1} parent=1 // pred_check
      _
    $region35: #{tpu_custom_call.1} parent=1 // pred_check_branch
      %141 = sbr.rel (0) target = $region37
    $region36: #{tpu_custom_call.1} parent=1 // pred_region
      %s143 = ssub.s32 256, 256
      %144 = vsyncadd [#allocation5], %s143
      %s145 = sshll.u32 [#allocation8], 4
      %s146 = int_to_ptr.vmem [resolvable:$true] %s145
      %151 = dma.vmem_to_hbm [thread:$0]  %s146, 256, %s4, [#allocation5], 128, 128, 8
    $region37: #{tpu_custom_call.1} parent=1 // pred_fallthru
      _
    // Predicated region
    $region38: #{tpu_custom_call.1} parent=1 // pred_check
      _
    $region39: #{tpu_custom_call.1} parent=1 // pred_check_branch
      %153 = sbr.rel (0) target = $region41
    $region40: #{tpu_custom_call.1} parent=1 // pred_region
      %154 = dma.done [#allocation5], 256
    $region41: #{tpu_custom_call.1} parent=1 // pred_fallthru
      _
    %155 = vsyncpa [#allocation4], 1
    %156 = vsyncpa [#allocation7], 1
    %157 = vsyncpa [#allocation5], 1

</llo_original>
